<compile_context>
chip_gen: v7x
topology: tpu7x:2x2x1
jax: 0.10.0
libtpu: 0.0.40
codegen_flags: <defaults>
</compile_context>

<pallas_src>
import functools

import jax
import jax.numpy as jnp
from jax.experimental import pallas as pl
from jax.experimental.pallas import tpu as pltpu


def _round_up(x: int, m: int) -> int:
    return (x + m - 1) // m * m


# ---------------------------------------------------------------------------
# Kernel: cross-entropy( embedding @ prototype^T , targets )
# ---------------------------------------------------------------------------
def _prototype_ce_kernel(feat_ref, proto_ref, tgt_ref, out_ref,
                         *, num_rows, num_classes, inv_n):
    feat = feat_ref[...]            # (Bp, Dp), input dtype (f32 or bf16)
    proto = proto_ref[...]          # (Cp, Dp), input dtype
    tgt = tgt_ref[...]              # (Bp, 1) int32

    # logits = feat @ proto^T  -- contract on the last dims (no in-kernel transpose).
    logits = jax.lax.dot_general(
        feat, proto,
        dimension_numbers=(((1,), (1,)), ((), ())),
        preferred_element_type=jnp.float32)               # (Bp, Cp) f32

    bp, cp = logits.shape
    col = jax.lax.broadcasted_iota(jnp.int32, (bp, cp), 1)
    class_valid = col < num_classes                        # bool, fused below

    # Numerically stable log-sum-exp restricted to the real classes.
    masked_logits = jnp.where(class_valid, logits, -jnp.inf)
    row_max = jnp.max(masked_logits, axis=1, keepdims=True)            # (Bp, 1)
    sum_exp = jnp.sum(jnp.exp(masked_logits - row_max), axis=1,
                      keepdims=True)                                    # (Bp, 1)
    lse = jnp.log(sum_exp) + row_max                                    # (Bp, 1)

    # Target logit per row via fused select + row-sum (no one-hot, no gather).
    tgt_logit = jnp.sum(jnp.where(col == tgt, logits, 0.0), axis=1,
                        keepdims=True)                                  # (Bp, 1)

    # Zero out padded rows, then mean over the real batch.
    row_idx = jax.lax.broadcasted_iota(jnp.int32, (bp, 1), 0)
    losses = jnp.where(row_idx < num_rows, lse - tgt_logit, 0.0)        # (Bp, 1)

    out_ref[0, 0] = jnp.sum(losses) * inv_n


# ---------------------------------------------------------------------------
# Wrapper (plain-JAX glue: padding + pallas_call plumbing)
# ---------------------------------------------------------------------------
@jax.jit
def prototype_contra_old_loss(embedding, old_prototype, targets):
    B, D = embedding.shape
    C, D_old = old_prototype.shape
    # TODO(synk): the reference's `.expand(...)` calls for D != D_old are no-ops
    # (result never assigned) and torch.mm requires matching D anyway; we just
    # zero-pad both operands to a common feature width.
    Dp = _round_up(max(D, D_old), 128)
    Bp = _round_up(B, 8)
    Cp = _round_up(C, 128)

    feat = jnp.zeros((Bp, Dp), embedding.dtype).at[:B, :D].set(embedding)
    proto = jnp.zeros((Cp, Dp), old_prototype.dtype).at[:C, :D_old].set(old_prototype)
    tgt = jnp.zeros((Bp, 1), jnp.int32).at[:B, 0].set(targets.astype(jnp.int32))

    kernel = functools.partial(_prototype_ce_kernel,
                               num_rows=B, num_classes=C, inv_n=1.0 / B)
    out = pl.pallas_call(
        kernel,
        out_shape=jax.ShapeDtypeStruct((1, 1), jnp.float32),
        in_specs=[
            pl.BlockSpec(memory_space=pltpu.MemorySpace.VMEM),
            pl.BlockSpec(memory_space=pltpu.MemorySpace.VMEM),
            pl.BlockSpec(memory_space=pltpu.MemorySpace.VMEM),
        ],
        out_specs=pl.BlockSpec(memory_space=pltpu.MemorySpace.SMEM),
        compiler_params=pltpu.CompilerParams(vmem_limit_bytes=48 * 1024 * 1024),
    )(feat, proto, tgt)
    return out[0, 0]


class PrototypeLoss:
    """Mirrors Prototype_loss (default loss_type='contra' -> CrossEntropyLoss,
    forward uses calculate_loss_prototype's default 'contra_old' branch)."""

    def __init__(self, cfg=None, loss_type="contra"):
        if loss_type not in ("contra", "contra_ract"):
            # TODO(synk): triplet / MSE criteria and the 'contra_new_old' branch
            # (host-side np.random prototype mixing) are not reachable from the
            # reference forward path; not implemented.
            raise NotImplementedError(f"Unknown loss type: {loss_type}")
        self.cfg = cfg
        self.loss_type = loss_type

    def __call__(self, embedding, old_prototype, targets):
        return prototype_contra_old_loss(embedding, old_prototype, targets)


if __name__ == "__main__":
    key = jax.random.PRNGKey(0)
    B, C, D = 8, 10, 32

    k1, k2, k3 = jax.random.split(key, 3)
    embedding = jax.random.normal(k1, (B, D), dtype=jnp.float32)
    old_prototype = jax.random.normal(k2, (C, D), dtype=jnp.float32)
    targets = jax.random.randint(k3, (B,), 0, C, dtype=jnp.int32)

    loss_fn = PrototypeLoss()
    loss = loss_fn(embedding, old_prototype, targets)
    jax.block_until_ready(loss)

    # plain-JAX reference: mean cross-entropy of (embedding @ prototype^T, targets)
    logits_ref = embedding @ old_prototype.T
    ref = jnp.mean(
        jax.nn.logsumexp(logits_ref, axis=1)
        - jnp.take_along_axis(logits_ref, targets[:, None], axis=1)[:, 0])

    assert jnp.isfinite(loss), loss
    assert jnp.allclose(loss, ref, atol=1e-4, rtol=1e-4), (loss, ref)
    print("KERNEL_OK")
</pallas_src>

<mosaic_0001>
module attributes {stable_mosaic.version = 11 : i64} {
  func.func @_prototype_ce_kernel(%arg0: memref<8x128xf32, #tpu.memory_space<vmem>>, %arg1: memref<128x128xf32, #tpu.memory_space<vmem>>, %arg2: memref<8x1xi32, #tpu.memory_space<vmem>>, %arg3: memref<1x1xf32, #tpu.memory_space<smem>>) attributes {dimension_semantics = [], scalar_prefetch = 0 : i64, scratch_operands = 0 : i64, tpu.core_type = #tpu.core_type<tc>} {
    %c0 = arith.constant 0 : index
    %c0_0 = arith.constant 0 : index
    %0 = vector.load %arg0[%c0, %c0_0] : memref<8x128xf32, #tpu.memory_space<vmem>>, vector<8x128xf32>
    %c0_1 = arith.constant 0 : index
    %c0_2 = arith.constant 0 : index
    %1 = vector.load %arg1[%c0_1, %c0_2] : memref<128x128xf32, #tpu.memory_space<vmem>>, vector<128x128xf32>
    %c0_3 = arith.constant 0 : index
    %c0_4 = arith.constant 0 : index
    %2 = vector.load %arg2[%c0_3, %c0_4] : memref<8x1xi32, #tpu.memory_space<vmem>>, vector<8x1xi32>
    %cst = arith.constant dense<0.000000e+00> : vector<8x128xf32>
    %3 = tpu.matmul %0, %1, %cst {dimension_numbers = #tpu.dot_dimension_numbers<[1], [1], [0], [0], [0, 0, 1, 0], [], []>} : vector<8x128xf32>, vector<128x128xf32>, vector<8x128xf32> -> vector<8x128xf32>
    %4 = tpu.iota {dimensions = array<i32: 1>} : vector<8x128xi32>
    %c10_i32 = arith.constant 10 : i32
    %5 = vector.broadcast %c10_i32 : i32 to vector<8x128xi32>
    %6 = arith.cmpi slt, %4, %5 : vector<8x128xi32>
    %cst_5 = arith.constant 0xFF800000 : f32
    %7 = vector.broadcast %cst_5 : f32 to vector<8x128xf32>
    %8 = arith.select %6, %3, %7 : vector<8x128xi1>, vector<8x128xf32>
    %cst_6 = arith.constant dense<0xFF800000> : vector<8xf32>
    %9 = vector.multi_reduction <maximumf>, %8, %cst_6 [1] : vector<8x128xf32> to vector<8xf32>
    %10 = vector.shape_cast %9 : vector<8xf32> to vector<8x1xf32>
    %11 = vector.broadcast %10 : vector<8x1xf32> to vector<8x128xf32>
    %12 = arith.subf %8, %11 : vector<8x128xf32>
    %13 = math.exp %12 : vector<8x128xf32>
    %cst_7 = arith.constant dense<0.000000e+00> : vector<8xf32>
    %14 = vector.multi_reduction <add>, %13, %cst_7 [1] : vector<8x128xf32> to vector<8xf32>
    %15 = vector.shape_cast %14 : vector<8xf32> to vector<8x1xf32>
    %16 = math.log %15 : vector<8x1xf32>
    %17 = arith.addf %16, %10 : vector<8x1xf32>
    %18 = vector.broadcast %2 : vector<8x1xi32> to vector<8x128xi32>
    %19 = arith.cmpi eq, %4, %18 : vector<8x128xi32>
    %cst_8 = arith.constant 0.000000e+00 : f32
    %20 = vector.broadcast %cst_8 : f32 to vector<8x128xf32>
    %21 = arith.select %19, %3, %20 : vector<8x128xi1>, vector<8x128xf32>
    %cst_9 = arith.constant dense<0.000000e+00> : vector<8xf32>
    %22 = vector.multi_reduction <add>, %21, %cst_9 [1] : vector<8x128xf32> to vector<8xf32>
    %23 = vector.shape_cast %22 : vector<8xf32> to vector<8x1xf32>
    %24 = tpu.iota {dimensions = array<i32: 0>} : vector<8x1xi32>
    %c8_i32 = arith.constant 8 : i32
    %25 = vector.broadcast %c8_i32 : i32 to vector<8x1xi32>
    %26 = arith.cmpi slt, %24, %25 : vector<8x1xi32>
    %27 = arith.subf %17, %23 : vector<8x1xf32>
    %cst_10 = arith.constant 0.000000e+00 : f32
    %28 = vector.broadcast %cst_10 : f32 to vector<8x1xf32>
    %29 = arith.select %26, %27, %28 : vector<8x1xi1>, vector<8x1xf32>
    %30 = vector.shape_cast %29 : vector<8x1xf32> to vector<1x8x1xf32>
    %cst_11 = arith.constant dense<0.000000e+00> : vector<1xf32>
    %31 = vector.multi_reduction <add>, %30, %cst_11 [1, 2] : vector<1x8x1xf32> to vector<1xf32>
    %32 = vector.shape_cast %31 : vector<1xf32> to vector<1x1x1xf32>
    %33 = vector.extract %32[0, 0, 0] : f32 from vector<1x1x1xf32>
    %cst_12 = arith.constant 1.250000e-01 : f32
    %34 = arith.mulf %33, %cst_12 : f32
    %c0_13 = arith.constant 0 : index
    %c0_14 = arith.constant 0 : index
    %35 = memref.load %arg3[%c0_13, %c0_14] : memref<1x1xf32, #tpu.memory_space<smem>>
    memref.store %34, %arg3[%c0_13, %c0_14] : memref<1x1xf32, #tpu.memory_space<smem>>
    return
  }
}

</mosaic_0001>

<llo_original>
// kernel: prototype_contra_old_loss.1
$region0: #{prototype_contra_old_loss.1}
  #allocation0 [shape = 'u32[]', space=smem, size = 0x4, offset = 0x4, fixed_abs, tag = 'smem constant byte address 0x4 - core index']
  #allocation1 [shape = 'u32[144,128]{1,0:T(1,128)}', space=vmem, size = 0x12000, scoped, tag = 'internal scratch']
  %s0 = inlined_call_operand.vmem [shape: f32[8,128], index: 0, kind: input, shape index: {}]
  %s1 = inlined_call_operand.vmem [shape: f32[128,128], index: 1, kind: input, shape index: {}]
  %s2 = inlined_call_operand.vmem [shape: s32[8,1], index: 2, kind: input, shape index: {}]
  %s3 = inlined_call_operand.hbm [shape: f32[1,1], index: 3, kind: output, shape index: {}]
  %s4 = sld [smem:[#allocation0]]
  $region22: #{prototype_contra_old_loss.1} parent=0
    _
  %s6 = ssub.s32 1, %s4
  %s7 = scalar_select 0, %s6, %s4
  $region1: #{prototype_contra_old_loss.1} parent=0
    #allocation2 [shape = 'u8[512]{0}', space=smem, size = 0x200, scoped, tag = 'output window, operand 0, single buffered']
    #allocation3 [shape = 's32[1]{0}', space=sflag, size = 0x4, scoped, tag = 'scoped memory for prototype_contra_old_loss.1']
    %8 = vsyncpa [#allocation3], 0
    // Predicated region
    $region2: #{prototype_contra_old_loss.1} parent=1 // pred_check
      _
    $region3: #{prototype_contra_old_loss.1} parent=1 // pred_check_branch
      %10 = sbr.rel (0) target = $region5
    $region4: #{prototype_contra_old_loss.1} parent=1 // pred_region
      _
    $region5: #{prototype_contra_old_loss.1} parent=1 // pred_fallthru
      _
    // Predicated region
    $region6: #{prototype_contra_old_loss.1} parent=1 // pred_check
      _
    $region7: #{prototype_contra_old_loss.1} parent=1 // pred_check_branch
      %12 = sbr.rel (0) target = $region9
    $region8: #{prototype_contra_old_loss.1} parent=1 // pred_region
      _
    $region9: #{prototype_contra_old_loss.1} parent=1 // pred_fallthru
      _
    // Predicated region
    $region10: #{prototype_contra_old_loss.1} parent=1 // pred_check
      _
    $region11: #{prototype_contra_old_loss.1} parent=1 // pred_check_branch
      %14 = sbr.rel (0) target = $region13
    $region12: #{prototype_contra_old_loss.1} parent=1 // pred_region
      _
    $region13: #{prototype_contra_old_loss.1} parent=1 // pred_fallthru
      _
    %v15 = vld [vmem:[%s0] sm:$0xff]
    %v16 = vld [vmem:[%s1] sm:$0xff]
    %v17 = vld [vmem:[%s1 + $0x8] sm:$0xff]
    %v18 = vld [vmem:[%s1 + $0x10] sm:$0xff]
    %v19 = vld [vmem:[%s1 + $0x18] sm:$0xff]
    %v20 = vld [vmem:[%s1 + $0x20] sm:$0xff]
    %v21 = vld [vmem:[%s1 + $0x28] sm:$0xff]
    %v22 = vld [vmem:[%s1 + $0x30] sm:$0xff]
    %v23 = vld [vmem:[%s1 + $0x38] sm:$0xff]
    %v24 = vld [vmem:[%s1 + $0x40] sm:$0xff]
    %v25 = vld [vmem:[%s1 + $0x48] sm:$0xff]
    %v26 = vld [vmem:[%s1 + $0x50] sm:$0xff]
    %v27 = vld [vmem:[%s1 + $0x58] sm:$0xff]
    %v28 = vld [vmem:[%s1 + $0x60] sm:$0xff]
    %v29 = vld [vmem:[%s1 + $0x68] sm:$0xff]
    %v30 = vld [vmem:[%s1 + $0x70] sm:$0xff]
    %v31 = vld [vmem:[%s1 + $0x78] sm:$0xff]
    %v32 = vld [vmem:[%s2] sm:$0xff]
    %33 = vmatprep.subr.mxu0 0.0
    %34 = vmatpush1.xpose.msra.mxu0 %v16
    %35 = vmatprep.subr.mxu0 0.0
    %36 = vmatpush1.xpose.msra.mxu0 %v17
    %37 = vmatprep.subr.mxu0 0.0
    %38 = vmatpush1.xpose.msra.mxu0 %v18
    %39 = vmatprep.subr.mxu0 0.0
    %40 = vmatpush1.xpose.msra.mxu0 %v19
    %41 = vmatprep.subr.mxu0 0.0
    %42 = vmatpush1.xpose.msra.mxu0 %v20
    %43 = vmatprep.subr.mxu0 0.0
    %44 = vmatpush1.xpose.msra.mxu0 %v21
    %45 = vmatprep.subr.mxu0 0.0
    %46 = vmatpush1.xpose.msra.mxu0 %v22
    %47 = vmatprep.subr.mxu0 0.0
    %48 = vmatpush1.xpose.msra.mxu0 %v23
    %49 = vmatprep.subr.mxu0 0.0
    %50 = vmatpush1.xpose.msra.mxu0 %v24
    %51 = vmatprep.subr.mxu0 0.0
    %52 = vmatpush1.xpose.msra.mxu0 %v25
    %53 = vmatprep.subr.mxu0 0.0
    %54 = vmatpush1.xpose.msra.mxu0 %v26
    %55 = vmatprep.subr.mxu0 0.0
    %56 = vmatpush1.xpose.msra.mxu0 %v27
    %57 = vmatprep.subr.mxu0 0.0
    %58 = vmatpush1.xpose.msra.mxu0 %v28
    %59 = vmatprep.subr.mxu0 0.0
    %60 = vmatpush1.xpose.msra.mxu0 %v29
    %61 = vmatprep.subr.mxu0 0.0
    %62 = vmatpush1.xpose.msra.mxu0 %v30
    %63 = vmatprep.subr.mxu0 0.0
    %64 = vmatpush1.xpose.msra.mxu0 %v31
    %65 = vmatprep.subr.mxu0 0.0
    %66 = vmatpush1.xpose.msra.mxu0 0.0
    %67 = vmatprep.subr.mxu0 0.0
    %68 = vmatpush1.xpose.msra.mxu0 0.0
    %69 = vmatprep.subr.mxu0 0.0
    %70 = vmatpush1.xpose.msra.mxu0 0.0
    %71 = vmatprep.subr.mxu0 0.0
    %72 = vmatpush1.xpose.msra.mxu0 0.0
    %73 = vmatprep.subr.mxu0 0.0
    %74 = vmatpush1.xpose.msra.mxu0 0.0
    %75 = vmatprep.subr.mxu0 0.0
    %76 = vmatpush1.xpose.msra.mxu0 0.0
    %77 = vmatprep.subr.mxu0 0.0
    %78 = vmatpush1.xpose.msra.mxu0 0.0
    %79 = vmatprep.subr.mxu0 0.0
    %80 = vmatpush1.xpose.msra.mxu0 0.0
    %81 = vmatprep.subr.mxu0 0.0
    %82 = vmatpush1.xpose.msra.mxu0 0.0
    %83 = vmatprep.subr.mxu0 0.0
    %84 = vmatpush1.xpose.msra.mxu0 0.0
    %85 = vmatprep.subr.mxu0 0.0
    %86 = vmatpush1.xpose.msra.mxu0 0.0
    %87 = vmatprep.subr.mxu0 0.0
    %88 = vmatpush1.xpose.msra.mxu0 0.0
    %89 = vmatprep.subr.mxu0 0.0
    %90 = vmatpush1.xpose.msra.mxu0 0.0
    %91 = vmatprep.subr.mxu0 0.0
    %92 = vmatpush1.xpose.msra.mxu0 0.0
    %93 = vmatprep.subr.mxu0 0.0
    %94 = vmatpush1.xpose.msra.mxu0 0.0
    %95 = vmatprep.subr.mxu0 0.0
    %96 = vmatpush1.xpose.msra.mxu0 0.0
    %97 = vmatprep.mubr.f32.mxu0 0.0
    %98 = vmatmul.mubr.f32.gmra.mrb[0].mxu0 %v15
    %v99 = vpop.f32.mrb[0].mxu0
    %v100 = vadd.f32 0.0, %v99
    %v101 = vpop.f32.mrb[0].mxu0
    %102 = vdwg.mxu0
    %v103 = vlaneseq
    %v104 = vand.u32 %v103, 127
    %vm105 = vcmp.lt.s32.totalorder %v104, 10
    %v106 = vsel %vm105, %v100, -inf
    %107 = vmax.xlane.f32.xlu0 %v106
    %v108 = vpop.xlane.xlu0 %107
    %v109 = vsub.f32 %v106, %v108
    %v110 = vmul.f32 %v109, 1.442695
    %v111 = vpow.pop %v110
    %112 = vadd.xlane.f32.xlu0 %v111
    %v113 = vpop.xlane.xlu0 %112
    %v114 = vlog2.pop %v113
    %v115 = vmul.f32 %v114, 0.6931472
    %v116 = vadd.f32 %v115, %v108
    %117 = vset.pattern.permute.xlu0 0
    %118 = vperm.xlu0 %117, %v32
    %v119 = vpop.permute.xlu0 %118
    %vm120 = vcmp.eq.s32.totalorder %v104, %v119
    %v121 = vsel %vm120, %v100, 0.0
    %122 = vadd.xlane.f32.xlu0 %v121
    %v123 = vpop.xlane.xlu0 %122
    %v124 = vlaneseq
    %v125 = vshrl.u32 %v124, 7
    %vm126 = vcmp.lt.s32.totalorder %v125, 8
    %v127 = vsub.f32 %v116, %v123
    %v128 = vsel %vm126, %v127, 0.0
    %vm129 = vcmask 7168
    %v130 = vsel %vm129, %v128, 0.0
    %131 = vadd.xlane.f32.xlu0 %v130
    %v132 = vpop.xlane.xlu0 %131
    %v133 = vrot.slane %v132, 4
    %v134 = vadd.f32 %v132, %v133
    %v135 = vrot.slane %v134, 2
    %v136 = vadd.f32 %v134, %v135
    %v137 = vrot.slane %v136, 1
    %v138 = vadd.f32 %v136, %v137
    %s139 = vtos %v138
    %s140 = smul.f32 %s139, 0.125
    %s141 = scalar_lea.smem [#allocation2], 0
    %142 = sst [smem:[%s141]] %s140
    // Predicated region
    $region14: #{prototype_contra_old_loss.1} parent=1 // pred_check
      _
    $region15: #{prototype_contra_old_loss.1} parent=1 // pred_check_branch
      %144 = sbr.rel (0) target = $region17
    $region16: #{prototype_contra_old_loss.1} parent=1 // pred_region
      %s146 = ssub.s32 16, 16
      %147 = vsyncadd [#allocation3], %s146
      %150 = dma.smem_to_hbm [#allocation2], 16, %s3, [#allocation3]
    $region17: #{prototype_contra_old_loss.1} parent=1 // pred_fallthru
      _
    // Predicated region
    $region18: #{prototype_contra_old_loss.1} parent=1 // pred_check
      _
    $region19: #{prototype_contra_old_loss.1} parent=1 // pred_check_branch
      %152 = sbr.rel (0) target = $region21
    $region20: #{prototype_contra_old_loss.1} parent=1 // pred_region
      %153 = dma.done [#allocation3], 16
    $region21: #{prototype_contra_old_loss.1} parent=1 // pred_fallthru
      _
    %154 = sfence
    %155 = vsyncpa [#allocation3], 1

</llo_original>
